<compile_context>
chip_gen: v5e
topology: v5e:2x2
jax: 0.10.0
libtpu: 0.0.40
codegen_flags: <defaults>
</compile_context>

<pallas_src>
import functools
import math

import jax
import jax.numpy as jnp
from jax import lax
from jax.experimental import pallas as pl
from jax.experimental.pallas import tpu as pltpu


def mdn_fused_kernel(x_ref, w1_ref, b1_ref, w2_ref, b2_ref, w3_ref, b3_ref,
                     out_ref, *, H, G, GO):
    wdt = w1_ref.dtype
    x = x_ref[...]

    # Layer 1: dense fusion of the 3 branches (no zero padding) -> one matmul.
    h1 = jnp.dot(x, w1_ref[...], preferred_element_type=jnp.float32) + b1_ref[...]
    h1 = jnp.maximum(h1, 0.0)

    # Layers 2+3 per branch.  Layer-2 block-diagonal dropped: three (H,H) dots
    # (3x fewer MACs / weight bytes than a dense (3H,3H)).  Layer-3 blocks are
    # lane-padded to the 128-wide output slab; summing them gives the slab:
    #   lanes [0,G) = pi logits, [G,G+GO) = log-sigma, [G+GO,G+2GO) = mu, rest 0.
    y = b3_ref[...]
    for k in range(3):
        hk = h1[:, k * H:(k + 1) * H].astype(wdt)
        hk = (jnp.dot(hk, w2_ref[k], preferred_element_type=jnp.float32)
              + b2_ref[:, k * H:(k + 1) * H])
        hk = jnp.maximum(hk, 0.0).astype(wdt)
        y = y + jnp.dot(hk, w3_ref[k], preferred_element_type=jnp.float32)

    col = lax.broadcasted_iota(jnp.int32, y.shape, 1)
    pi_mask = col < G
    sig_mask = (col >= G) & (col < G + GO)

    # Masked, max-stabilized softmax over the pi lanes (exact normalization).
    neg_big = jnp.float32(-1e30)           # f32 epilogue only; safe constant
    logits = jnp.where(pi_mask, y, neg_big)
    m = jnp.max(logits, axis=1, keepdims=True)

    # One exp pass feeds both the softmax numerator and sigma = exp(log-sigma).
    earg = jnp.where(pi_mask, y - m, jnp.where(sig_mask, y, 0.0))
    ex = jnp.exp(earg)

    e = jnp.where(pi_mask, ex, 0.0)
    denom = jnp.sum(e, axis=1, keepdims=True)
    pi_vals = e / denom                    # exact divide: rows sum to 1

    out_ref[...] = jnp.where(pi_mask, pi_vals,
                             jnp.where(sig_mask, ex, y)).astype(out_ref.dtype)


def _pick_block_b(B):
    """Single grid step when B fits one tile; 256-512 row tiles for large B."""
    if B <= 512:
        return B
    for cand in (512, 384, 256, 128, 64, 32, 16, 8):
        if B % cand == 0:
            return cand
    return B   # no usable divisor: fall back to a single full-batch tile


def pack_fused_params(params, H, G, O, out_pad, weight_dtype=jnp.float32):
    """Pack the 3 branch MLPs: fused layer-1, stacked layer-2, padded layer-3."""
    GO = G * O
    w1 = jnp.concatenate(
        [params["pi_w1"], params["sg_w1"], params["mu_w1"]], axis=1)
    b1 = jnp.concatenate(
        [params["pi_b1"], params["sg_b1"], params["mu_b1"]], axis=1)

    w2 = jnp.stack([params["pi_w2"], params["sg_w2"], params["mu_w2"]], axis=0)
    b2 = jnp.concatenate(
        [params["pi_b2"], params["sg_b2"], params["mu_b2"]], axis=1)

    def place(w, off, width):
        out = jnp.zeros((H, out_pad), jnp.float32)
        return out.at[:, off:off + width].set(w)

    w3 = jnp.stack([place(params["pi_w3"], 0, G),
                    place(params["sg_w3"], G, GO),
                    place(params["mu_w3"], G + GO, GO)], axis=0)
    b3 = jnp.zeros((1, out_pad), jnp.float32)
    b3 = b3.at[0, 0:G].set(params["pi_b3"][0])
    b3 = b3.at[0, G:G + GO].set(params["sg_b3"][0])
    b3 = b3.at[0, G + GO:G + 2 * GO].set(params["mu_b3"][0])

    # Weights may be bf16 (native MXU dtype); biases stay f32 (f32 epilogue).
    w1, w2, w3 = (a.astype(weight_dtype) for a in (w1, w2, w3))
    return w1, b1, w2, b2, w3, b3


def mdn_forward(x, params, *, num_gaussians, out_features, block_b=None,
                weight_dtype=jnp.float32):
    """x: (B, D) float32.  params: dict of pre-transposed weights/biases."""
    B, D = x.shape
    G, O = num_gaussians, out_features
    GO = G * O
    H = params["pi_w1"].shape[1]
    out_w = G + 2 * GO
    out_pad = max(128, pl.cdiv(out_w, 128) * 128)   # lane-dense output slab

    if block_b is None:
        block_b = _pick_block_b(B)
    assert B % block_b == 0

    w1, b1, w2, b2, w3, b3 = pack_fused_params(
        params, H, G, O, out_pad, weight_dtype=weight_dtype)
    x = x.astype(weight_dtype)

    def full_spec(arr):
        n = arr.ndim
        # whole (small) packed parameter resident in VMEM for every grid step
        return pl.BlockSpec(arr.shape, lambda i, _n=n: (0,) * _n)

    grid = (B // block_b,)
    kernel = functools.partial(mdn_fused_kernel, H=H, G=G, GO=GO)

    # Raise the scoped VMEM limit only if the (double-buffered) resident
    # footprint would exceed the ~32 MiB default.
    wbytes = sum(int(a.size) * a.dtype.itemsize for a in (w1, b1, w2, b2, w3, b3))
    iobytes = block_b * (D * x.dtype.itemsize + out_pad * 4)
    resident = 2 * (wbytes + iobytes)
    vmem_limit = int(resident * 1.25) if resident > 24 * 1024 * 1024 else None

    fused = pl.pallas_call(
        kernel,
        grid=grid,
        in_specs=[pl.BlockSpec((block_b, D), lambda i: (i, 0))]
        + [full_spec(a) for a in (w1, b1, w2, b2, w3, b3)],
        out_specs=pl.BlockSpec((block_b, out_pad), lambda i: (i, 0)),
        out_shape=jax.ShapeDtypeStruct((B, out_pad), jnp.float32),
        compiler_params=pltpu.CompilerParams(
            dimension_semantics=("parallel",),
            vmem_limit_bytes=vmem_limit),
    )(x, w1, b1, w2, b2, w3, b3)

    # glue: slice the fused slab and view as (B, G, O), matching torch .view
    pi = fused[:, :G]
    sigma = fused[:, G:G + GO].reshape(B, G, O)
    mu = fused[:, G + GO:G + 2 * GO].reshape(B, G, O)
    return pi, sigma, mu


def init_linear(key, fan_in, fan_out):
    """PyTorch-style nn.Linear init, weight returned pre-transposed (in, out)."""
    kw, kb = jax.random.split(key)
    bound = 1.0 / math.sqrt(fan_in)
    w = jax.random.uniform(kw, (fan_in, fan_out), jnp.float32, -bound, bound)
    b = jax.random.uniform(kb, (1, fan_out), jnp.float32, -bound, bound)
    return w, b


def make_params(key, in_features, num_hiddens, out_features, num_gaussians):
    params = {}
    branch_out = {"pi": num_gaussians,
                  "sg": out_features * num_gaussians,
                  "mu": out_features * num_gaussians}
    keys = jax.random.split(key, 9)
    k = 0
    for branch in ("pi", "sg", "mu"):
        dims = [(in_features, num_hiddens),
                (num_hiddens, num_hiddens),
                (num_hiddens, branch_out[branch])]
        for li, (fi, fo) in enumerate(dims, start=1):
            w, b = init_linear(keys[k], fi, fo)
            k += 1
            params[f"{branch}_w{li}"] = w
            params[f"{branch}_b{li}"] = b
    return params


def mdn_reference(x, params, *, num_gaussians, out_features):
    """Pure-JAX reference for validation (matches the PyTorch module)."""
    def mlp(p, pre):
        h = jnp.maximum(x @ p[f"{pre}_w1"] + p[f"{pre}_b1"], 0.0)
        h = jnp.maximum(h @ p[f"{pre}_w2"] + p[f"{pre}_b2"], 0.0)
        return h @ p[f"{pre}_w3"] + p[f"{pre}_b3"]

    pi = jax.nn.softmax(mlp(params, "pi"), axis=1)
    sigma = jnp.exp(mlp(params, "sg")).reshape(-1, num_gaussians, out_features)
    mu = mlp(params, "mu").reshape(-1, num_gaussians, out_features)
    return pi, sigma, mu


if __name__ == "__main__":
    B = 16
    IN_FEATURES = 16
    NUM_HIDDENS = 32
    OUT_FEATURES = 4
    NUM_GAUSSIANS = 5

    key = jax.random.PRNGKey(0)
    kx, kp = jax.random.split(key)
    x = jax.random.normal(kx, (B, IN_FEATURES), jnp.float32)
    params = make_params(kp, IN_FEATURES, NUM_HIDDENS, OUT_FEATURES, NUM_GAUSSIANS)

    # --- f32 path: strict check against the pure-JAX reference ---------------
    fwd = functools.partial(
        mdn_forward, num_gaussians=NUM_GAUSSIANS, out_features=OUT_FEATURES)
    pi, sigma, mu = jax.block_until_ready(fwd(x, params))

    pi_r, sigma_r, mu_r = mdn_reference(
        x, params, num_gaussians=NUM_GAUSSIANS, out_features=OUT_FEATURES)
    assert pi.shape == (B, NUM_GAUSSIANS)
    assert sigma.shape == (B, NUM_GAUSSIANS, OUT_FEATURES)
    assert mu.shape == (B, NUM_GAUSSIANS, OUT_FEATURES)
    assert jnp.allclose(pi, pi_r, atol=1e-4, rtol=1e-4)
    assert jnp.allclose(sigma, sigma_r, atol=1e-4, rtol=1e-4)
    assert jnp.allclose(mu, mu_r, atol=1e-4, rtol=1e-4)
    # exact softmax -> rows normalized
    assert jnp.allclose(jnp.sum(pi, axis=1), jnp.ones((B,)), atol=1e-5)

    # --- bf16-weight path: smoke test (shapes, finiteness, normalization) ----
    pi_b, sigma_b, mu_b = jax.block_until_ready(
        fwd(x, params, weight_dtype=jnp.bfloat16))
    assert pi_b.shape == (B, NUM_GAUSSIANS)
    assert sigma_b.shape == (B, NUM_GAUSSIANS, OUT_FEATURES)
    assert mu_b.shape == (B, NUM_GAUSSIANS, OUT_FEATURES)
    assert bool(jnp.all(jnp.isfinite(pi_b)))
    assert bool(jnp.all(jnp.isfinite(sigma_b)))
    assert bool(jnp.all(jnp.isfinite(mu_b)))
    assert bool(jnp.all(sigma_b > 0.0))
    assert jnp.allclose(jnp.sum(pi_b, axis=1), jnp.ones((B,)), atol=1e-3)

    print("KERNEL_OK")
</pallas_src>

<mosaic_0001>
module attributes {stable_mosaic.version = 11 : i64} {
  func.func @mdn_fused_kernel(%arg0: i32, %arg1: memref<16x16xf32, #tpu.memory_space<vmem>>, %arg2: memref<16x96xf32, #tpu.memory_space<vmem>>, %arg3: memref<1x96xf32, #tpu.memory_space<vmem>>, %arg4: memref<3x32x32xf32, #tpu.memory_space<vmem>>, %arg5: memref<1x96xf32, #tpu.memory_space<vmem>>, %arg6: memref<3x32x128xf32, #tpu.memory_space<vmem>>, %arg7: memref<1x128xf32, #tpu.memory_space<vmem>>, %arg8: memref<16x128xf32, #tpu.memory_space<vmem>>) attributes {dimension_semantics = [#tpu.dimension_semantics<parallel>], iteration_bounds = array<i64: 1>, scalar_prefetch = 0 : i64, scratch_operands = 0 : i64, tpu.core_type = #tpu.core_type<tc>, window_params = [{transform_indices = @transform_0, window_bounds = array<i64: 16, 16>}, {pipeline_mode = #tpu.pipeline_mode<synchronous>, transform_indices = @transform_1, window_bounds = array<i64: 16, 96>}, {pipeline_mode = #tpu.pipeline_mode<synchronous>, transform_indices = @transform_2, window_bounds = array<i64: 1, 96>}, {pipeline_mode = #tpu.pipeline_mode<synchronous>, transform_indices = @transform_3, window_bounds = array<i64: 3, 32, 32>}, {pipeline_mode = #tpu.pipeline_mode<synchronous>, transform_indices = @transform_4, window_bounds = array<i64: 1, 96>}, {pipeline_mode = #tpu.pipeline_mode<synchronous>, transform_indices = @transform_5, window_bounds = array<i64: 3, 32, 128>}, {pipeline_mode = #tpu.pipeline_mode<synchronous>, transform_indices = @transform_6, window_bounds = array<i64: 1, 128>}, {transform_indices = @transform_7, window_bounds = array<i64: 16, 128>}]} {
    %c0 = arith.constant 0 : index
    %c0_0 = arith.constant 0 : index
    %0 = vector.load %arg1[%c0, %c0_0] : memref<16x16xf32, #tpu.memory_space<vmem>>, vector<16x16xf32>
    %c0_1 = arith.constant 0 : index
    %c0_2 = arith.constant 0 : index
    %1 = vector.load %arg2[%c0_1, %c0_2] : memref<16x96xf32, #tpu.memory_space<vmem>>, vector<16x96xf32>
    %cst = arith.constant dense<0.000000e+00> : vector<16x96xf32>
    %2 = tpu.matmul %0, %1, %cst {dimension_numbers = #tpu.dot_dimension_numbers<[1], [0], [0], [1], [0, 0, 1, 1], [], []>} : vector<16x16xf32>, vector<16x96xf32>, vector<16x96xf32> -> vector<16x96xf32>
    %c0_3 = arith.constant 0 : index
    %c0_4 = arith.constant 0 : index
    %3 = vector.load %arg3[%c0_3, %c0_4] : memref<1x96xf32, #tpu.memory_space<vmem>>, vector<1x96xf32>
    %4 = vector.broadcast %3 : vector<1x96xf32> to vector<16x96xf32>
    %5 = arith.addf %2, %4 : vector<16x96xf32>
    %cst_5 = arith.constant 0.000000e+00 : f32
    %6 = vector.broadcast %cst_5 : f32 to vector<16x96xf32>
    %7 = arith.maximumf %5, %6 : vector<16x96xf32>
    %c0_6 = arith.constant 0 : index
    %c0_7 = arith.constant 0 : index
    %8 = vector.load %arg7[%c0_6, %c0_7] : memref<1x128xf32, #tpu.memory_space<vmem>>, vector<1x128xf32>
    %9 = vector.extract_strided_slice %7 {offsets = [0, 0], sizes = [16, 32], strides = [1, 1]} : vector<16x96xf32> to vector<16x32xf32>
    %c0_8 = arith.constant 0 : index
    %c0_9 = arith.constant 0 : index
    %c0_10 = arith.constant 0 : index
    %10 = vector.load %arg4[%c0_8, %c0_9, %c0_10] : memref<3x32x32xf32, #tpu.memory_space<vmem>>, vector<1x32x32xf32>
    %11 = vector.shape_cast %10 : vector<1x32x32xf32> to vector<32x32xf32>
    %cst_11 = arith.constant dense<0.000000e+00> : vector<16x32xf32>
    %12 = tpu.matmul %9, %11, %cst_11 {dimension_numbers = #tpu.dot_dimension_numbers<[1], [0], [0], [1], [0, 0, 1, 1], [], []>} : vector<16x32xf32>, vector<32x32xf32>, vector<16x32xf32> -> vector<16x32xf32>
    %c0_12 = arith.constant 0 : index
    %c0_13 = arith.constant 0 : index
    %13 = vector.load %arg5[%c0_12, %c0_13] : memref<1x96xf32, #tpu.memory_space<vmem>>, vector<1x32xf32>
    %14 = vector.broadcast %13 : vector<1x32xf32> to vector<16x32xf32>
    %15 = arith.addf %12, %14 : vector<16x32xf32>
    %cst_14 = arith.constant 0.000000e+00 : f32
    %16 = vector.broadcast %cst_14 : f32 to vector<16x32xf32>
    %17 = arith.maximumf %15, %16 : vector<16x32xf32>
    %c0_15 = arith.constant 0 : index
    %c0_16 = arith.constant 0 : index
    %c0_17 = arith.constant 0 : index
    %18 = vector.load %arg6[%c0_15, %c0_16, %c0_17] : memref<3x32x128xf32, #tpu.memory_space<vmem>>, vector<1x32x128xf32>
    %19 = vector.shape_cast %18 : vector<1x32x128xf32> to vector<32x128xf32>
    %cst_18 = arith.constant dense<0.000000e+00> : vector<16x128xf32>
    %20 = tpu.matmul %17, %19, %cst_18 {dimension_numbers = #tpu.dot_dimension_numbers<[1], [0], [0], [1], [0, 0, 1, 1], [], []>} : vector<16x32xf32>, vector<32x128xf32>, vector<16x128xf32> -> vector<16x128xf32>
    %21 = vector.broadcast %8 : vector<1x128xf32> to vector<16x128xf32>
    %22 = arith.addf %21, %20 : vector<16x128xf32>
    %23 = vector.extract_strided_slice %7 {offsets = [0, 32], sizes = [16, 32], strides = [1, 1]} : vector<16x96xf32> to vector<16x32xf32>
    %c1 = arith.constant 1 : index
    %c0_19 = arith.constant 0 : index
    %c0_20 = arith.constant 0 : index
    %24 = vector.load %arg4[%c1, %c0_19, %c0_20] : memref<3x32x32xf32, #tpu.memory_space<vmem>>, vector<1x32x32xf32>
    %25 = vector.shape_cast %24 : vector<1x32x32xf32> to vector<32x32xf32>
    %cst_21 = arith.constant dense<0.000000e+00> : vector<16x32xf32>
    %26 = tpu.matmul %23, %25, %cst_21 {dimension_numbers = #tpu.dot_dimension_numbers<[1], [0], [0], [1], [0, 0, 1, 1], [], []>} : vector<16x32xf32>, vector<32x32xf32>, vector<16x32xf32> -> vector<16x32xf32>
    %c0_22 = arith.constant 0 : index
    %c32 = arith.constant 32 : index
    %27 = vector.load %arg5[%c0_22, %c32] : memref<1x96xf32, #tpu.memory_space<vmem>>, vector<1x32xf32>
    %28 = vector.broadcast %27 : vector<1x32xf32> to vector<16x32xf32>
    %29 = arith.addf %26, %28 : vector<16x32xf32>
    %cst_23 = arith.constant 0.000000e+00 : f32
    %30 = vector.broadcast %cst_23 : f32 to vector<16x32xf32>
    %31 = arith.maximumf %29, %30 : vector<16x32xf32>
    %c1_24 = arith.constant 1 : index
    %c0_25 = arith.constant 0 : index
    %c0_26 = arith.constant 0 : index
    %32 = vector.load %arg6[%c1_24, %c0_25, %c0_26] : memref<3x32x128xf32, #tpu.memory_space<vmem>>, vector<1x32x128xf32>
    %33 = vector.shape_cast %32 : vector<1x32x128xf32> to vector<32x128xf32>
    %cst_27 = arith.constant dense<0.000000e+00> : vector<16x128xf32>
    %34 = tpu.matmul %31, %33, %cst_27 {dimension_numbers = #tpu.dot_dimension_numbers<[1], [0], [0], [1], [0, 0, 1, 1], [], []>} : vector<16x32xf32>, vector<32x128xf32>, vector<16x128xf32> -> vector<16x128xf32>
    %35 = arith.addf %22, %34 : vector<16x128xf32>
    %36 = vector.extract_strided_slice %7 {offsets = [0, 64], sizes = [16, 32], strides = [1, 1]} : vector<16x96xf32> to vector<16x32xf32>
    %c2 = arith.constant 2 : index
    %c0_28 = arith.constant 0 : index
    %c0_29 = arith.constant 0 : index
    %37 = vector.load %arg4[%c2, %c0_28, %c0_29] : memref<3x32x32xf32, #tpu.memory_space<vmem>>, vector<1x32x32xf32>
    %38 = vector.shape_cast %37 : vector<1x32x32xf32> to vector<32x32xf32>
    %cst_30 = arith.constant dense<0.000000e+00> : vector<16x32xf32>
    %39 = tpu.matmul %36, %38, %cst_30 {dimension_numbers = #tpu.dot_dimension_numbers<[1], [0], [0], [1], [0, 0, 1, 1], [], []>} : vector<16x32xf32>, vector<32x32xf32>, vector<16x32xf32> -> vector<16x32xf32>
    %c0_31 = arith.constant 0 : index
    %c64 = arith.constant 64 : index
    %40 = vector.load %arg5[%c0_31, %c64] : memref<1x96xf32, #tpu.memory_space<vmem>>, vector<1x32xf32>
    %41 = vector.broadcast %40 : vector<1x32xf32> to vector<16x32xf32>
    %42 = arith.addf %39, %41 : vector<16x32xf32>
    %cst_32 = arith.constant 0.000000e+00 : f32
    %43 = vector.broadcast %cst_32 : f32 to vector<16x32xf32>
    %44 = arith.maximumf %42, %43 : vector<16x32xf32>
    %c2_33 = arith.constant 2 : index
    %c0_34 = arith.constant 0 : index
    %c0_35 = arith.constant 0 : index
    %45 = vector.load %arg6[%c2_33, %c0_34, %c0_35] : memref<3x32x128xf32, #tpu.memory_space<vmem>>, vector<1x32x128xf32>
    %46 = vector.shape_cast %45 : vector<1x32x128xf32> to vector<32x128xf32>
    %cst_36 = arith.constant dense<0.000000e+00> : vector<16x128xf32>
    %47 = tpu.matmul %44, %46, %cst_36 {dimension_numbers = #tpu.dot_dimension_numbers<[1], [0], [0], [1], [0, 0, 1, 1], [], []>} : vector<16x32xf32>, vector<32x128xf32>, vector<16x128xf32> -> vector<16x128xf32>
    %48 = arith.addf %35, %47 : vector<16x128xf32>
    %49 = tpu.iota {dimensions = array<i32: 1>} : vector<16x128xi32>
    %c5_i32 = arith.constant 5 : i32
    %50 = vector.broadcast %c5_i32 : i32 to vector<16x128xi32>
    %51 = arith.cmpi slt, %49, %50 : vector<16x128xi32>
    %c5_i32_37 = arith.constant 5 : i32
    %52 = vector.broadcast %c5_i32_37 : i32 to vector<16x128xi32>
    %53 = arith.cmpi sge, %49, %52 : vector<16x128xi32>
    %c25_i32 = arith.constant 25 : i32
    %54 = vector.broadcast %c25_i32 : i32 to vector<16x128xi32>
    %55 = arith.cmpi slt, %49, %54 : vector<16x128xi32>
    %56 = arith.andi %53, %55 : vector<16x128xi1>
    %cst_38 = arith.constant -1.000000e+30 : f32
    %57 = vector.broadcast %cst_38 : f32 to vector<16x128xf32>
    %58 = arith.select %51, %48, %57 : vector<16x128xi1>, vector<16x128xf32>
    %cst_39 = arith.constant dense<0xFF800000> : vector<16xf32>
    %59 = vector.multi_reduction <maximumf>, %58, %cst_39 [1] : vector<16x128xf32> to vector<16xf32>
    %60 = vector.shape_cast %59 : vector<16xf32> to vector<16x1xf32>
    %61 = vector.broadcast %60 : vector<16x1xf32> to vector<16x128xf32>
    %62 = arith.subf %48, %61 : vector<16x128xf32>
    %cst_40 = arith.constant 0.000000e+00 : f32
    %63 = vector.broadcast %cst_40 : f32 to vector<16x128xf32>
    %64 = arith.select %56, %48, %63 : vector<16x128xi1>, vector<16x128xf32>
    %65 = arith.select %51, %62, %64 : vector<16x128xi1>, vector<16x128xf32>
    %66 = math.exp %65 : vector<16x128xf32>
    %cst_41 = arith.constant 0.000000e+00 : f32
    %67 = vector.broadcast %cst_41 : f32 to vector<16x128xf32>
    %68 = arith.select %51, %66, %67 : vector<16x128xi1>, vector<16x128xf32>
    %cst_42 = arith.constant dense<0.000000e+00> : vector<16xf32>
    %69 = vector.multi_reduction <add>, %68, %cst_42 [1] : vector<16x128xf32> to vector<16xf32>
    %70 = vector.shape_cast %69 : vector<16xf32> to vector<16x1xf32>
    %71 = vector.broadcast %70 : vector<16x1xf32> to vector<16x128xf32>
    %72 = arith.divf %68, %71 : vector<16x128xf32>
    %73 = arith.select %56, %66, %48 : vector<16x128xi1>, vector<16x128xf32>
    %74 = arith.select %51, %72, %73 : vector<16x128xi1>, vector<16x128xf32>
    %c0_43 = arith.constant 0 : index
    %c0_44 = arith.constant 0 : index
    %75 = vector.load %arg8[%c0_43, %c0_44] : memref<16x128xf32, #tpu.memory_space<vmem>>, vector<16x128xf32>
    tpu.vector_store %arg8[%c0_43, %c0_44], %74 {strides = array<i32>} : memref<16x128xf32, #tpu.memory_space<vmem>>, vector<16x128xf32>,
    return
  }
  func.func @transform_0(%arg0: i32) -> (i32, i32) {
    %c0_i32 = arith.constant 0 : i32
    %c0_i32_0 = arith.constant 0 : i32
    return %arg0, %c0_i32 : i32, i32
  }
  func.func @transform_1(%arg0: i32) -> (i32, i32) {
    %c0_i32 = arith.constant 0 : i32
    %c0_i32_0 = arith.constant 0 : i32
    %c0_i32_1 = arith.constant 0 : i32
    return %c0_i32, %c0_i32_0 : i32, i32
  }
  func.func @transform_2(%arg0: i32) -> (i32, i32) {
    %c0_i32 = arith.constant 0 : i32
    %c0_i32_0 = arith.constant 0 : i32
    %c0_i32_1 = arith.constant 0 : i32
    return %c0_i32, %c0_i32_0 : i32, i32
  }
  func.func @transform_3(%arg0: i32) -> (i32, i32, i32) {
    %c0_i32 = arith.constant 0 : i32
    %c0_i32_0 = arith.constant 0 : i32
    %c0_i32_1 = arith.constant 0 : i32
    %c0_i32_2 = arith.constant 0 : i32
    return %c0_i32, %c0_i32_0, %c0_i32_1 : i32, i32, i32
  }
  func.func @transform_4(%arg0: i32) -> (i32, i32) {
    %c0_i32 = arith.constant 0 : i32
    %c0_i32_0 = arith.constant 0 : i32
    %c0_i32_1 = arith.constant 0 : i32
    return %c0_i32, %c0_i32_0 : i32, i32
  }
  func.func @transform_5(%arg0: i32) -> (i32, i32, i32) {
    %c0_i32 = arith.constant 0 : i32
    %c0_i32_0 = arith.constant 0 : i32
    %c0_i32_1 = arith.constant 0 : i32
    %c0_i32_2 = arith.constant 0 : i32
    return %c0_i32, %c0_i32_0, %c0_i32_1 : i32, i32, i32
  }
  func.func @transform_6(%arg0: i32) -> (i32, i32) {
    %c0_i32 = arith.constant 0 : i32
    %c0_i32_0 = arith.constant 0 : i32
    %c0_i32_1 = arith.constant 0 : i32
    return %c0_i32, %c0_i32_0 : i32, i32
  }
  func.func @transform_7(%arg0: i32) -> (i32, i32) {
    %c0_i32 = arith.constant 0 : i32
    %c0_i32_0 = arith.constant 0 : i32
    return %arg0, %c0_i32 : i32, i32
  }
}

</mosaic_0001>

<llo_original>
// kernel: tpu_custom_call.1
$region0: #{tpu_custom_call.1}
  #allocation0 [shape = 'u32[]', space=smem, size = 0x4, offset = 0x4, fixed_abs, tag = 'smem constant byte address 0x4 - core index']
  #allocation1 [shape = 'u32[72,128]{1,0:T(1,128)}', space=vmem, size = 0x9000, scoped, tag = 'internal scratch']
  %s0 = inlined_call_operand.hbm [shape: f32[16,16], index: 0, kind: input, shape index: {}]
  %s1 = inlined_call_operand.hbm [shape: f32[16,96], index: 1, kind: input, shape index: {}]
  %s2 = inlined_call_operand.vmem [shape: f32[1,96], index: 2, kind: input, shape index: {}]
  %s3 = inlined_call_operand.hbm [shape: f32[3,32,32], index: 3, kind: input, shape index: {}]
  %s4 = inlined_call_operand.vmem [shape: f32[1,96], index: 4, kind: input, shape index: {}]
  %s5 = inlined_call_operand.hbm [shape: f32[3,32,128], index: 5, kind: input, shape index: {}]
  %s6 = inlined_call_operand.vmem [shape: f32[1,128], index: 6, kind: input, shape index: {}]
  %s7 = inlined_call_operand.hbm [shape: f32[16,128], index: 7, kind: output, shape index: {}]
  %s8 = sld [smem:[#allocation0]]
  $region54: #{tpu_custom_call.1} parent=0
    _
  %s10 = ssub.s32 1, %s8
  %s11 = scalar_select 0, %s10, %s8
  $region1: #{tpu_custom_call.1} parent=0
    #allocation2 [shape = 'u8[8192]{0}', space=vmem, size = 0x2000, scoped, tag = 'input window, operand 0, single buffered']
    #allocation3 [shape = 's32[1]{0}', space=sflag, size = 0x4, scoped, tag = 'scoped memory for tpu_custom_call.1']
    #allocation4 [shape = 's32[1]{0}', space=sflag, size = 0x4, scoped, tag = 'scoped memory for tpu_custom_call.1']
    #allocation5 [shape = 'u8[8192]{0}', space=vmem, size = 0x2000, scoped, tag = 'input window, operand 1, single buffered']
    #allocation6 [shape = 's32[1]{0}', space=sflag, size = 0x4, scoped, tag = 'scoped memory for tpu_custom_call.1']
    #allocation7 [shape = 'u8[49152]{0}', space=vmem, size = 0xc000, scoped, tag = 'input window, operand 3, single buffered']
    #allocation8 [shape = 'u8[49152]{0}', space=vmem, size = 0xc000, scoped, tag = 'input window, operand 5, single buffered']
    #allocation9 [shape = 's32[1]{0}', space=sflag, size = 0x4, scoped, tag = 'scoped memory for tpu_custom_call.1']
    #allocation10 [shape = 'u8[8192]{0}', space=vmem, size = 0x2000, scoped, tag = 'output window, operand 0, single buffered']
    %12 = vsyncpa [#allocation3], 0
    %13 = vsyncpa [#allocation6], 0
    %14 = vsyncpa [#allocation9], 0
    %15 = vsyncpa [#allocation4], 0
    // Predicated region
    $region2: #{tpu_custom_call.1} parent=1 // pred_check
      _
    $region3: #{tpu_custom_call.1} parent=1 // pred_check_branch
      %17 = sbr.rel (0) target = $region5
    $region4: #{tpu_custom_call.1} parent=1 // pred_region
      %19 = vsyncadd [#allocation3], 0
      %s20 = sshll.u32 %s0, 4
      %s21 = int_to_ptr.hbm [resolvable:$true] %s20
      %s22 = sshll.u32 [#allocation2], 4
      %s23 = int_to_ptr.vmem [resolvable:$true] %s22
      %28 = dma.hbm_to_vmem [thread:$0]  %s21, 256, %s23, [#allocation3], 128, 128, 8
    $region5: #{tpu_custom_call.1} parent=1 // pred_fallthru
      _
    // Predicated region
    $region6: #{tpu_custom_call.1} parent=1 // pred_check
      _
    $region7: #{tpu_custom_call.1} parent=1 // pred_check_branch
      %30 = sbr.rel (0) target = $region9
    $region8: #{tpu_custom_call.1} parent=1 // pred_region
      %32 = vsyncadd [#allocation6], 0
      %s33 = sshll.u32 %s1, 4
      %s34 = int_to_ptr.hbm [resolvable:$true] %s33
      %s35 = sshll.u32 [#allocation5], 4
      %s36 = int_to_ptr.vmem [resolvable:$true] %s35
      %41 = dma.hbm_to_vmem [thread:$0]  %s34, 256, %s36, [#allocation6], 128, 128, 8
    $region9: #{tpu_custom_call.1} parent=1 // pred_fallthru
      _
    // Predicated region
    $region10: #{tpu_custom_call.1} parent=1 // pred_check
      _
    $region11: #{tpu_custom_call.1} parent=1 // pred_check_branch
      %43 = sbr.rel (0) target = $region13
    $region12: #{tpu_custom_call.1} parent=1 // pred_region
      _
    $region13: #{tpu_custom_call.1} parent=1 // pred_fallthru
      _
    // Predicated region
    $region14: #{tpu_custom_call.1} parent=1 // pred_check
      _
    $region15: #{tpu_custom_call.1} parent=1 // pred_check_branch
      %45 = sbr.rel (0) target = $region17
    $region16: #{tpu_custom_call.1} parent=1 // pred_region
      %47 = vsyncadd [#allocation6], 0
      %s48 = sshll.u32 %s3, 4
      %s49 = int_to_ptr.hbm [resolvable:$true] %s48
      %s50 = sshll.u32 [#allocation7], 4
      %s51 = int_to_ptr.vmem [resolvable:$true] %s50
      %56 = dma.hbm_to_vmem [thread:$0]  %s49, 1536, %s51, [#allocation6], 128, 128, 8
    $region17: #{tpu_custom_call.1} parent=1 // pred_fallthru
      _
    // Predicated region
    $region18: #{tpu_custom_call.1} parent=1 // pred_check
      _
    $region19: #{tpu_custom_call.1} parent=1 // pred_check_branch
      %58 = sbr.rel (0) target = $region21
    $region20: #{tpu_custom_call.1} parent=1 // pred_region
      _
    $region21: #{tpu_custom_call.1} parent=1 // pred_fallthru
      _
    // Predicated region
    $region22: #{tpu_custom_call.1} parent=1 // pred_check
      _
    $region23: #{tpu_custom_call.1} parent=1 // pred_check_branch
      %60 = sbr.rel (0) target = $region25
    $region24: #{tpu_custom_call.1} parent=1 // pred_region
      %62 = vsyncadd [#allocation9], 0
      %s63 = sshll.u32 %s5, 4
      %s64 = int_to_ptr.hbm [resolvable:$true] %s63
      %s65 = sshll.u32 [#allocation8], 4
      %s66 = int_to_ptr.vmem [resolvable:$true] %s65
      %71 = dma.hbm_to_vmem [thread:$0]  %s64, 1536, %s66, [#allocation9], 128, 128, 8
    $region25: #{tpu_custom_call.1} parent=1 // pred_fallthru
      _
    // Predicated region
    $region26: #{tpu_custom_call.1} parent=1 // pred_check
      _
    $region27: #{tpu_custom_call.1} parent=1 // pred_check_branch
      %73 = sbr.rel (0) target = $region29
    $region28: #{tpu_custom_call.1} parent=1 // pred_region
      _
    $region29: #{tpu_custom_call.1} parent=1 // pred_fallthru
      _
    // Predicated region
    $region30: #{tpu_custom_call.1} parent=1 // pred_check
      _
    $region31: #{tpu_custom_call.1} parent=1 // pred_check_branch
      %75 = sbr.rel (0) target = $region33
    $region32: #{tpu_custom_call.1} parent=1 // pred_region
      %77 = dma.done [#allocation3], 256
    $region33: #{tpu_custom_call.1} parent=1 // pred_fallthru
      _
    // Predicated region
    $region34: #{tpu_custom_call.1} parent=1 // pred_check
      _
    $region35: #{tpu_custom_call.1} parent=1 // pred_check_branch
      %79 = sbr.rel (0) target = $region37
    $region36: #{tpu_custom_call.1} parent=1 // pred_region
      %81 = dma.done [#allocation6], 256
    $region37: #{tpu_custom_call.1} parent=1 // pred_fallthru
      _
    // Predicated region
    $region38: #{tpu_custom_call.1} parent=1 // pred_check
      _
    $region39: #{tpu_custom_call.1} parent=1 // pred_check_branch
      %83 = sbr.rel (0) target = $region41
    $region40: #{tpu_custom_call.1} parent=1 // pred_region
      %85 = dma.done [#allocation6], 1536
    $region41: #{tpu_custom_call.1} parent=1 // pred_fallthru
      _
    // Predicated region
    $region42: #{tpu_custom_call.1} parent=1 // pred_check
      _
    $region43: #{tpu_custom_call.1} parent=1 // pred_check_branch
      %87 = sbr.rel (0) target = $region45
    $region44: #{tpu_custom_call.1} parent=1 // pred_region
      %89 = dma.done [#allocation9], 1536
    $region45: #{tpu_custom_call.1} parent=1 // pred_fallthru
      _
    %v90 = vld [vmem:[#allocation2] sm:$0xff]
    %v91 = vld [vmem:[#allocation2 + $0x8] sm:$0xff]
    %v92 = vld [vmem:[#allocation5] sm:$0xff]
    %v93 = vld [vmem:[#allocation5 + $0x8] sm:$0xff]
    %v94 = vld [vmem:[%s2] sm:$0x1]
    %v96 = vperm.slane %v94, 0
    %vm98 = vcmask 130048
    %v100 = vsel %vm98, %v90, 0
    %v103 = vsel %vm98, %v91, 0
    %105 = vmatpush.msra.mxu0 0.0
    %106 = vmatpush.msra.mxu0 0.0
    %107 = vmatpush.msra.mxu0 0.0
    %108 = vmatpush.msra.mxu0 0.0
    %109 = vmatpush.msra.mxu0 0.0
    %110 = vmatpush.msra.mxu0 0.0
    %111 = vmatpush.msra.mxu0 0.0
    %112 = vmatpush.msra.mxu0 0.0
    %113 = vmatpush.msra.mxu0 0.0
    %114 = vmatpush.msra.mxu0 0.0
    %115 = vmatpush.msra.mxu0 0.0
    %116 = vmatpush.msra.mxu0 0.0
    %117 = vmatpush.msra.mxu0 0.0
    %118 = vmatpush.msra.mxu0 0.0
    %119 = vmatpush.msra.mxu0 %v93
    %120 = vmatpush.msra.mxu0 %v92
    %121 = vmatmul.f32.gmra.mxu0 %v100
    %v122 = vpop.f32.mrf.mxu0
    %v123 = vadd.f32 %v96, %v122
    %124 = vmatmul.f32.gmra.mxu0 %v103
    %v125 = vpop.f32.mrf.mxu0
    %v126 = vadd.f32 %v96, %v125
    %127 = vdwg.mxu0
    %v128 = vmax.f32 %v123, 0.0
    %v129 = vmax.f32 %v126, 0.0
    %v130 = vld [vmem:[%s6] sm:$0x1]
    %v131 = vld [vmem:[#allocation7] sm:$0xff]
    %v132 = vld [vmem:[#allocation7 + $0x8] sm:$0xff]
    %v133 = vld [vmem:[#allocation7 + $0x10] sm:$0xff]
    %v134 = vld [vmem:[#allocation7 + $0x18] sm:$0xff]
    %v135 = vld [vmem:[%s4] sm:$0x1]
    %v137 = vperm.slane %v135, 0
    %vm139 = vcmask 261120
    %v141 = vsel %vm139, %v128, 0
    %v144 = vsel %vm139, %v129, 0
    %146 = vmatpush.msra.mxu0 0.0
    %147 = vmatpush.msra.mxu0 0.0
    %148 = vmatpush.msra.mxu0 0.0
    %149 = vmatpush.msra.mxu0 0.0
    %150 = vmatpush.msra.mxu0 0.0
    %151 = vmatpush.msra.mxu0 0.0
    %152 = vmatpush.msra.mxu0 0.0
    %153 = vmatpush.msra.mxu0 0.0
    %154 = vmatpush.msra.mxu0 0.0
    %155 = vmatpush.msra.mxu0 0.0
    %156 = vmatpush.msra.mxu0 0.0
    %157 = vmatpush.msra.mxu0 0.0
    %158 = vmatpush.msra.mxu0 %v134
    %159 = vmatpush.msra.mxu0 %v133
    %160 = vmatpush.msra.mxu0 %v132
    %161 = vmatpush.msra.mxu0 %v131
    %162 = vmatmul.f32.gmra.mxu0 %v141
    %v163 = vpop.f32.mrf.mxu0
    %v164 = vadd.f32 %v137, %v163
    %165 = vmatmul.f32.gmra.mxu0 %v144
    %v166 = vpop.f32.mrf.mxu0
    %v167 = vadd.f32 %v137, %v166
    %168 = vdwg.mxu0
    %v169 = vmax.f32 %v164, 0.0
    %v170 = vmax.f32 %v167, 0.0
    %v171 = vld [vmem:[#allocation8] sm:$0xff]
    %v172 = vld [vmem:[#allocation8 + $0x8] sm:$0xff]
    %v173 = vld [vmem:[#allocation8 + $0x10] sm:$0xff]
    %v174 = vld [vmem:[#allocation8 + $0x18] sm:$0xff]
    %v176 = vsel %vm139, %v169, 0
    %v179 = vsel %vm139, %v170, 0
    %181 = vmatpush.msra.mxu0 0.0
    %182 = vmatpush.msra.mxu0 0.0
    %183 = vmatpush.msra.mxu0 0.0
    %184 = vmatpush.msra.mxu0 0.0
    %185 = vmatpush.msra.mxu0 0.0
    %186 = vmatpush.msra.mxu0 0.0
    %187 = vmatpush.msra.mxu0 0.0
    %188 = vmatpush.msra.mxu0 0.0
    %189 = vmatpush.msra.mxu0 0.0
    %190 = vmatpush.msra.mxu0 0.0
    %191 = vmatpush.msra.mxu0 0.0
    %192 = vmatpush.msra.mxu0 0.0
    %193 = vmatpush.msra.mxu0 %v174
    %194 = vmatpush.msra.mxu0 %v173
    %195 = vmatpush.msra.mxu0 %v172
    %196 = vmatpush.msra.mxu0 %v171
    %197 = vmatmul.f32.gmra.mxu0 %v176
    %v198 = vpop.f32.mrf.mxu0
    %v199 = vadd.f32 0.0, %v198
    %200 = vmatmul.f32.gmra.mxu0 %v179
    %v201 = vpop.f32.mrf.mxu0
    %v202 = vadd.f32 0.0, %v201
    %203 = vdwg.mxu0
    %v205 = vperm.slane %v130, 0
    %v207 = vadd.f32 %v205, %v199
    %v208 = vadd.f32 %v205, %v202
    %s209 = scalar_lea.vmem [#allocation7], 32
    %v210 = vld [vmem:[%s209] sm:$0xff]
    %v211 = vld [vmem:[%s209 + $0x8] sm:$0xff]
    %v212 = vld [vmem:[%s209 + $0x10] sm:$0xff]
    %v213 = vld [vmem:[%s209 + $0x18] sm:$0xff]
    %214 = vrot.lane.b32.xlu0 %v128, 96
    %v215 = vpop.permute.xlu0 %214
    %216 = vrot.lane.b32.xlu0 %v129, 96
    %v217 = vpop.permute.xlu0 %216
    %218 = vrot.lane.b32.xlu0 %v137, 96
    %v219 = vpop.permute.xlu0 %218
    %v221 = vsel %vm139, %v215, 0
    %v223 = vsel %vm139, %v217, 0
    %225 = vmatpush.msra.mxu0 0.0
    %226 = vmatpush.msra.mxu0 0.0
    %227 = vmatpush.msra.mxu0 0.0
    %228 = vmatpush.msra.mxu0 0.0
    %229 = vmatpush.msra.mxu0 0.0
    %230 = vmatpush.msra.mxu0 0.0
    %231 = vmatpush.msra.mxu0 0.0
    %232 = vmatpush.msra.mxu0 0.0
    %233 = vmatpush.msra.mxu0 0.0
    %234 = vmatpush.msra.mxu0 0.0
    %235 = vmatpush.msra.mxu0 0.0
    %236 = vmatpush.msra.mxu0 0.0
    %237 = vmatpush.msra.mxu0 %v213
    %238 = vmatpush.msra.mxu0 %v212
    %239 = vmatpush.msra.mxu0 %v211
    %240 = vmatpush.msra.mxu0 %v210
    %241 = vmatmul.f32.gmra.mxu0 %v221
    %v242 = vpop.f32.mrf.mxu0
    %v243 = vadd.f32 %v219, %v242
    %244 = vmatmul.f32.gmra.mxu0 %v223
    %v245 = vpop.f32.mrf.mxu0
    %v246 = vadd.f32 %v219, %v245
    %247 = vdwg.mxu0
    %v248 = vmax.f32 %v243, 0.0
    %v249 = vmax.f32 %v246, 0.0
    %s250 = scalar_lea.vmem [#allocation8], 32
    %v251 = vld [vmem:[%s250] sm:$0xff]
    %v252 = vld [vmem:[%s250 + $0x8] sm:$0xff]
    %v253 = vld [vmem:[%s250 + $0x10] sm:$0xff]
    %v254 = vld [vmem:[%s250 + $0x18] sm:$0xff]
    %v256 = vsel %vm139, %v248, 0
    %v259 = vsel %vm139, %v249, 0
    %261 = vmatpush.msra.mxu0 0.0
    %262 = vmatpush.msra.mxu0 0.0
    %263 = vmatpush.msra.mxu0 0.0
    %264 = vmatpush.msra.mxu0 0.0
    %265 = vmatpush.msra.mxu0 0.0
    %266 = vmatpush.msra.mxu0 0.0
    %267 = vmatpush.msra.mxu0 0.0
    %268 = vmatpush.msra.mxu0 0.0
    %269 = vmatpush.msra.mxu0 0.0
    %270 = vmatpush.msra.mxu0 0.0
    %271 = vmatpush.msra.mxu0 0.0
    %272 = vmatpush.msra.mxu0 0.0
    %273 = vmatpush.msra.mxu0 %v254
    %274 = vmatpush.msra.mxu0 %v253
    %275 = vmatpush.msra.mxu0 %v252
    %276 = vmatpush.msra.mxu0 %v251
    %277 = vmatmul.f32.gmra.mxu0 %v256
    %v278 = vpop.f32.mrf.mxu0
    %v279 = vadd.f32 0.0, %v278
    %280 = vmatmul.f32.gmra.mxu0 %v259
    %v281 = vpop.f32.mrf.mxu0
    %v282 = vadd.f32 0.0, %v281
    %283 = vdwg.mxu0
    %v284 = vadd.f32 %v207, %v279
    %v285 = vadd.f32 %v208, %v282
    %s286 = scalar_lea.vmem [#allocation7], 64
    %v287 = vld [vmem:[%s286] sm:$0xff]
    %v288 = vld [vmem:[%s286 + $0x8] sm:$0xff]
    %v289 = vld [vmem:[%s286 + $0x10] sm:$0xff]
    %v290 = vld [vmem:[%s286 + $0x18] sm:$0xff]
    %291 = vrot.lane.b32.xlu0 %v128, 64
    %v292 = vpop.permute.xlu0 %291
    %293 = vrot.lane.b32.xlu0 %v129, 64
    %v294 = vpop.permute.xlu0 %293
    %295 = vrot.lane.b32.xlu0 %v137, 64
    %v296 = vpop.permute.xlu0 %295
    %v298 = vsel %vm139, %v292, 0
    %v300 = vsel %vm139, %v294, 0
    %302 = vmatpush.msra.mxu0 0.0
    %303 = vmatpush.msra.mxu0 0.0
    %304 = vmatpush.msra.mxu0 0.0
    %305 = vmatpush.msra.mxu0 0.0
    %306 = vmatpush.msra.mxu0 0.0
    %307 = vmatpush.msra.mxu0 0.0
    %308 = vmatpush.msra.mxu0 0.0
    %309 = vmatpush.msra.mxu0 0.0
    %310 = vmatpush.msra.mxu0 0.0
    %311 = vmatpush.msra.mxu0 0.0
    %312 = vmatpush.msra.mxu0 0.0
    %313 = vmatpush.msra.mxu0 0.0
    %314 = vmatpush.msra.mxu0 %v290
    %315 = vmatpush.msra.mxu0 %v289
    %316 = vmatpush.msra.mxu0 %v288
    %317 = vmatpush.msra.mxu0 %v287
    %318 = vmatmul.f32.gmra.mxu0 %v298
    %v319 = vpop.f32.mrf.mxu0
    %v320 = vadd.f32 %v296, %v319
    %321 = vmatmul.f32.gmra.mxu0 %v300
    %v322 = vpop.f32.mrf.mxu0
    %v323 = vadd.f32 %v296, %v322
    %324 = vdwg.mxu0
    %v325 = vmax.f32 %v320, 0.0
    %v326 = vmax.f32 %v323, 0.0
    %s327 = scalar_lea.vmem [#allocation8], 64
    %v328 = vld [vmem:[%s327] sm:$0xff]
    %v329 = vld [vmem:[%s327 + $0x8] sm:$0xff]
    %v330 = vld [vmem:[%s327 + $0x10] sm:$0xff]
    %v331 = vld [vmem:[%s327 + $0x18] sm:$0xff]
    %v333 = vsel %vm139, %v325, 0
    %v336 = vsel %vm139, %v326, 0
    %338 = vmatpush.msra.mxu0 0.0
    %339 = vmatpush.msra.mxu0 0.0
    %340 = vmatpush.msra.mxu0 0.0
    %341 = vmatpush.msra.mxu0 0.0
    %342 = vmatpush.msra.mxu0 0.0
    %343 = vmatpush.msra.mxu0 0.0
    %344 = vmatpush.msra.mxu0 0.0
    %345 = vmatpush.msra.mxu0 0.0
    %346 = vmatpush.msra.mxu0 0.0
    %347 = vmatpush.msra.mxu0 0.0
    %348 = vmatpush.msra.mxu0 0.0
    %349 = vmatpush.msra.mxu0 0.0
    %350 = vmatpush.msra.mxu0 %v331
    %351 = vmatpush.msra.mxu0 %v330
    %352 = vmatpush.msra.mxu0 %v329
    %353 = vmatpush.msra.mxu0 %v328
    %354 = vmatmul.f32.gmra.mxu0 %v333
    %v355 = vpop.f32.mrf.mxu0
    %v356 = vadd.f32 0.0, %v355
    %357 = vmatmul.f32.gmra.mxu0 %v336
    %v358 = vpop.f32.mrf.mxu0
    %v359 = vadd.f32 0.0, %v358
    %360 = vdwg.mxu0
    %v361 = vadd.f32 %v284, %v356
    %v362 = vadd.f32 %v285, %v359
    %v363 = vlaneseq
    %v364 = vand.u32 %v363, 127
    %vm365 = vcmp.lt.s32.totalorder %v364, 5
    %vm366 = vcmp.ge.s32.totalorder %v364, 5
    %vm367 = vcmp.lt.s32.totalorder %v364, 25
    %vm368 = vmand %vm366, %vm367
    %v369 = vsel %vm365, %v361, -1e+30
    %v370 = vsel %vm365, %v362, -1e+30
    %371 = vmax.xlane.f32.xlu0 %v369
    %v372 = vpop.xlane.xlu0 %371
    %373 = vmax.xlane.f32.xlu0 %v370
    %v374 = vpop.xlane.xlu0 %373
    %v375 = vsub.f32 %v361, %v372
    %v376 = vsub.f32 %v362, %v374
    %v377 = vsel %vm368, %v361, 0.0
    %v378 = vsel %vm368, %v362, 0.0
    %v379 = vsel %vm365, %v375, %v377
    %v380 = vsel %vm365, %v376, %v378
    %v381 = vmul.f32 %v379, 1.442695
    %v382 = vpow.pop %v381
    %v383 = vmul.f32 %v380, 1.442695
    %v384 = vpow.pop %v383
    %v385 = vsel %vm365, %v382, 0.0
    %v386 = vsel %vm365, %v384, 0.0
    %387 = vadd.xlane.f32.xlu0 %v385
    %v388 = vpop.xlane.xlu0 %387
    %389 = vadd.xlane.f32.xlu0 %v386
    %v390 = vpop.xlane.xlu0 %389
    %v391 = vrcp.pop %v388
    %v392 = vmul.f32 %v388, %v391
    %v393 = vsub.f32 1.0, %v392
    %v394 = vmul.f32 %v391, %v393
    %v395 = vadd.f32 %v391, %v394
    %vm396 = vweird.f32 %v388
    %vm397 = vweird.f32 %v391
    %vm398 = vmor %vm396, %vm397
    %v399 = vsel %vm398, %v391, %v395
    %v400 = vand.u32 2147483647, %v388
    %vm401 = vcmp.eq.f32.partialorder %v400, 8.507059e+37
    %v402 = vand.u32 %v388, 2147483648
    %v403 = vor.u32 1.1754944e-38, %v402
    %v404 = vsel %vm401, %v403, %v399
    %v405 = vmul.f32 %v385, %v404
    %v406 = vrcp.pop %v390
    %v407 = vmul.f32 %v390, %v406
    %v408 = vsub.f32 1.0, %v407
    %v409 = vmul.f32 %v406, %v408
    %v410 = vadd.f32 %v406, %v409
    %vm411 = vweird.f32 %v390
    %vm412 = vweird.f32 %v406
    %vm413 = vmor %vm411, %vm412
    %v414 = vsel %vm413, %v406, %v410
    %v415 = vand.u32 2147483647, %v390
    %vm416 = vcmp.eq.f32.partialorder %v415, 8.507059e+37
    %v417 = vand.u32 %v390, 2147483648
    %v418 = vor.u32 1.1754944e-38, %v417
    %v419 = vsel %vm416, %v418, %v414
    %v420 = vmul.f32 %v386, %v419
    %v421 = vsel %vm368, %v382, %v361
    %v422 = vsel %vm368, %v384, %v362
    %v423 = vsel %vm365, %v405, %v421
    %v424 = vsel %vm365, %v420, %v422
    %425 = vst [vmem:[#allocation10] sm:$0xff] %v423
    %426 = vst [vmem:[#allocation10 + $0x8] sm:$0xff] %v424
    // Predicated region
    $region46: #{tpu_custom_call.1} parent=1 // pred_check
      _
    $region47: #{tpu_custom_call.1} parent=1 // pred_check_branch
      %428 = sbr.rel (0) target = $region49
    $region48: #{tpu_custom_call.1} parent=1 // pred_region
      %430 = vsyncadd [#allocation4], 0
      %s431 = sshll.u32 [#allocation10], 4
      %s432 = int_to_ptr.vmem [resolvable:$true] %s431
      %s433 = sshll.u32 %s7, 4
      %s434 = int_to_ptr.hbm [resolvable:$true] %s433
      %439 = dma.vmem_to_hbm [thread:$0]  %s432, 256, %s434, [#allocation4], 128, 128, 8
    $region49: #{tpu_custom_call.1} parent=1 // pred_fallthru
      _
    // Predicated region
    $region50: #{tpu_custom_call.1} parent=1 // pred_check
      _
    $region51: #{tpu_custom_call.1} parent=1 // pred_check_branch
      %441 = sbr.rel (0) target = $region53
    $region52: #{tpu_custom_call.1} parent=1 // pred_region
      %443 = dma.done [#allocation4], 256
    $region53: #{tpu_custom_call.1} parent=1 // pred_fallthru
      _
    %444 = vsyncpa [#allocation3], 1
    %445 = vsyncpa [#allocation6], 1
    %446 = vsyncpa [#allocation9], 1
    %447 = vsyncpa [#allocation4], 1

</llo_original>
